<compile_context>
chip_gen: v7x
topology: tpu7x:2x2x1
jax: 0.10.0
libtpu: 0.0.40
codegen_flags: <defaults>
</compile_context>

<pallas_src>
import jax
import jax.numpy as jnp
from jax import lax
from jax.experimental import pallas as pl
from jax.experimental.pallas import tpu as pltpu


def _linear_net_kernel(x_ref, w1_ref, b1_ref, w2_ref, b2_ref, o_ref):
    # o[0, :] = relu(x @ w1 + b1) @ w2 + b2 for one batch tile, emitted lane-dense.
    h = jnp.dot(x_ref[...], w1_ref[...],
                preferred_element_type=jnp.float32)          # [tB, H]  (MXU)
    h = jnp.maximum(h + b1_ref[...], 0.0)                    # bias + ReLU (VPU)

    # Final projection (O == 1): contract [1, H] against h's feature axis to get a
    # lane-dense [1, tB] row directly (transposed-RHS MXU feed, like q @ k.T).
    y = lax.dot_general(
        w2_ref[...], h,                                       # [1, H] x [tB, H] -> [1, tB]
        dimension_numbers=(((1,), (1,)), ((), ())),
        preferred_element_type=jnp.float32,
    )
    o_ref[...] = (y + b2_ref[...]).astype(o_ref.dtype)        # b2 is [1, 1], broadcasts


def linear_net_forward(x, w1, b1, w2, b2, *, block_rows=4096):
    """LinearNet forward: relu(x @ w1 + b1) @ w2 + b2.

    x: [B, F]; w1: [F, H]; b1: [1, H]; w2: [H, 1]; b2: [1, 1]. Returns [B, 1] f32.
    (w1/w2 are stored [in, out], i.e. the transpose of PyTorch's Linear.weight.)
    """
    B, F = x.shape
    H = w1.shape[1]
    assert w2.shape == (H, 1), "kernel specializes the n_output=1 head of LinearNet"

    def _round_up(n, m):
        return (n + m - 1) // m * m

    if B <= block_rows:
        tb = max(8, _round_up(B, 8))      # single full-extent tile
    else:
        tb = block_rows                    # multiple of 8 and 128 -> aligned blocks
    b_pad = _round_up(B, tb)
    num_tiles = b_pad // tb

    if b_pad != B:
        x = jnp.pad(x, ((0, b_pad - B), (0, 0)))

    w2_row = w2.reshape(1, H)              # column -> row so the kernel contracts on lanes
    b2_sc = b2.reshape(1, 1)

    out = pl.pallas_call(
        _linear_net_kernel,
        out_shape=jax.ShapeDtypeStruct((1, b_pad), jnp.float32),
        grid=(num_tiles,),
        in_specs=[
            pl.BlockSpec((tb, F), lambda i: (i, 0)),   # stream batch tiles of x
            pl.BlockSpec((F, H), lambda i: (0, 0)),    # weights stay VMEM-resident
            pl.BlockSpec((1, H), lambda i: (0, 0)),
            pl.BlockSpec((1, H), lambda i: (0, 0)),
            pl.BlockSpec((1, 1), lambda i: (0, 0)),
        ],
        # Lane-dense output: each grid step writes a full [1, tb] row slab.
        out_specs=pl.BlockSpec((1, tb), lambda i: (0, i)),
        compiler_params=pltpu.CompilerParams(
            dimension_semantics=("parallel",),         # shard batch tiles across TCs (v7x)
        ),
    )(x, w1, b1, w2_row, b2_sc)

    # Layout plumbing only: [1, B_pad] slab back to [B, 1].
    return out.reshape(b_pad, 1)[:B]


if __name__ == "__main__":
    n_feature, n_hidden, n_output = 8, 16, 1
    batch = 8

    key = jax.random.PRNGKey(0)
    k_x, k_w1, k_b1, k_w2, k_b2 = jax.random.split(key, 5)

    # Deterministic init (PyTorch Linear default: U(-1/sqrt(fan_in), 1/sqrt(fan_in))).
    bound1 = 1.0 / (n_feature ** 0.5)
    bound2 = 1.0 / (n_hidden ** 0.5)
    w1 = jax.random.uniform(k_w1, (n_feature, n_hidden), jnp.float32, -bound1, bound1)
    b1 = jax.random.uniform(k_b1, (1, n_hidden), jnp.float32, -bound1, bound1)
    w2 = jax.random.uniform(k_w2, (n_hidden, n_output), jnp.float32, -bound2, bound2)
    b2 = jax.random.uniform(k_b2, (1, n_output), jnp.float32, -bound2, bound2)

    x = jax.random.normal(k_x, (batch, n_feature), jnp.float32)

    out = linear_net_forward(x, w1, b1, w2, b2)
    out = jax.block_until_ready(out)

    ref = jnp.maximum(x @ w1 + b1, 0.0) @ w2 + b2
    assert out.shape == (batch, n_output)
    assert jnp.allclose(out, ref, atol=1e-5, rtol=1e-5)

    # Also exercise the streaming (grid > 1) path: padding, tiled x blocks, and the
    # lane-dense output slab. block_rows=1024 keeps the test batch small.
    xb = jax.random.normal(jax.random.PRNGKey(1), (2088, n_feature), jnp.float32)
    out_b = jax.block_until_ready(linear_net_forward(xb, w1, b1, w2, b2, block_rows=1024))
    ref_b = jnp.maximum(xb @ w1 + b1, 0.0) @ w2 + b2
    assert out_b.shape == ref_b.shape
    assert jnp.allclose(out_b, ref_b, atol=1e-4, rtol=1e-4)

    print("KERNEL_OK")
</pallas_src>

<mosaic_0001>
module attributes {stable_mosaic.version = 11 : i64} {
  func.func @_linear_net_kernel(%arg0: i32, %arg1: memref<8x8xf32, #tpu.memory_space<vmem>>, %arg2: memref<8x16xf32, #tpu.memory_space<vmem>>, %arg3: memref<1x16xf32, #tpu.memory_space<vmem>>, %arg4: memref<1x16xf32, #tpu.memory_space<vmem>>, %arg5: memref<1x1xf32, #tpu.memory_space<vmem>>, %arg6: memref<1x8xf32, #tpu.memory_space<vmem>>) attributes {dimension_semantics = [#tpu.dimension_semantics<parallel>], iteration_bounds = array<i64: 1>, scalar_prefetch = 0 : i64, scratch_operands = 0 : i64, tpu.core_type = #tpu.core_type<tc>, window_params = [{transform_indices = @transform_0, window_bounds = array<i64: 8, 8>}, {pipeline_mode = #tpu.pipeline_mode<synchronous>, transform_indices = @transform_1, window_bounds = array<i64: 8, 16>}, {pipeline_mode = #tpu.pipeline_mode<synchronous>, transform_indices = @transform_2, window_bounds = array<i64: 1, 16>}, {pipeline_mode = #tpu.pipeline_mode<synchronous>, transform_indices = @transform_3, window_bounds = array<i64: 1, 16>}, {pipeline_mode = #tpu.pipeline_mode<synchronous>, transform_indices = @transform_4, window_bounds = array<i64: 1, 1>}, {transform_indices = @transform_5, window_bounds = array<i64: 1, 8>}]} {
    %c0 = arith.constant 0 : index
    %c0_0 = arith.constant 0 : index
    %0 = vector.load %arg1[%c0, %c0_0] : memref<8x8xf32, #tpu.memory_space<vmem>>, vector<8x8xf32>
    %c0_1 = arith.constant 0 : index
    %c0_2 = arith.constant 0 : index
    %1 = vector.load %arg2[%c0_1, %c0_2] : memref<8x16xf32, #tpu.memory_space<vmem>>, vector<8x16xf32>
    %cst = arith.constant dense<0.000000e+00> : vector<8x16xf32>
    %2 = tpu.matmul %0, %1, %cst {dimension_numbers = #tpu.dot_dimension_numbers<[1], [0], [0], [1], [0, 0, 1, 1], [], []>} : vector<8x8xf32>, vector<8x16xf32>, vector<8x16xf32> -> vector<8x16xf32>
    %c0_3 = arith.constant 0 : index
    %c0_4 = arith.constant 0 : index
    %3 = vector.load %arg3[%c0_3, %c0_4] : memref<1x16xf32, #tpu.memory_space<vmem>>, vector<1x16xf32>
    %4 = vector.broadcast %3 : vector<1x16xf32> to vector<8x16xf32>
    %5 = arith.addf %2, %4 : vector<8x16xf32>
    %cst_5 = arith.constant 0.000000e+00 : f32
    %6 = vector.broadcast %cst_5 : f32 to vector<8x16xf32>
    %7 = arith.maximumf %5, %6 : vector<8x16xf32>
    %c0_6 = arith.constant 0 : index
    %c0_7 = arith.constant 0 : index
    %8 = vector.load %arg4[%c0_6, %c0_7] : memref<1x16xf32, #tpu.memory_space<vmem>>, vector<1x16xf32>
    %cst_8 = arith.constant dense<0.000000e+00> : vector<1x8xf32>
    %9 = tpu.matmul %8, %7, %cst_8 {dimension_numbers = #tpu.dot_dimension_numbers<[1], [1], [0], [0], [0, 0, 1, 0], [], []>} : vector<1x16xf32>, vector<8x16xf32>, vector<1x8xf32> -> vector<1x8xf32>
    %c0_9 = arith.constant 0 : index
    %c0_10 = arith.constant 0 : index
    %10 = vector.load %arg5[%c0_9, %c0_10] : memref<1x1xf32, #tpu.memory_space<vmem>>, vector<1x1xf32>
    %11 = vector.broadcast %10 : vector<1x1xf32> to vector<1x8xf32>
    %12 = arith.addf %9, %11 : vector<1x8xf32>
    %c0_11 = arith.constant 0 : index
    %c0_12 = arith.constant 0 : index
    %13 = vector.load %arg6[%c0_11, %c0_12] : memref<1x8xf32, #tpu.memory_space<vmem>>, vector<1x8xf32>
    tpu.vector_store %arg6[%c0_11, %c0_12], %12 {strides = array<i32>} : memref<1x8xf32, #tpu.memory_space<vmem>>, vector<1x8xf32>,
    return
  }
  func.func @transform_0(%arg0: i32) -> (i32, i32) {
    %c0_i32 = arith.constant 0 : i32
    %c0_i32_0 = arith.constant 0 : i32
    return %arg0, %c0_i32 : i32, i32
  }
  func.func @transform_1(%arg0: i32) -> (i32, i32) {
    %c0_i32 = arith.constant 0 : i32
    %c0_i32_0 = arith.constant 0 : i32
    %c0_i32_1 = arith.constant 0 : i32
    return %c0_i32, %c0_i32_0 : i32, i32
  }
  func.func @transform_2(%arg0: i32) -> (i32, i32) {
    %c0_i32 = arith.constant 0 : i32
    %c0_i32_0 = arith.constant 0 : i32
    %c0_i32_1 = arith.constant 0 : i32
    return %c0_i32, %c0_i32_0 : i32, i32
  }
  func.func @transform_3(%arg0: i32) -> (i32, i32) {
    %c0_i32 = arith.constant 0 : i32
    %c0_i32_0 = arith.constant 0 : i32
    %c0_i32_1 = arith.constant 0 : i32
    return %c0_i32, %c0_i32_0 : i32, i32
  }
  func.func @transform_4(%arg0: i32) -> (i32, i32) {
    %c0_i32 = arith.constant 0 : i32
    %c0_i32_0 = arith.constant 0 : i32
    %c0_i32_1 = arith.constant 0 : i32
    return %c0_i32, %c0_i32_0 : i32, i32
  }
  func.func @transform_5(%arg0: i32) -> (i32, i32) {
    %c0_i32 = arith.constant 0 : i32
    %c0_i32_0 = arith.constant 0 : i32
    return %c0_i32, %arg0 : i32, i32
  }
}

</mosaic_0001>

<llo_original>
// kernel: tpu_custom_call.1
$region0: #{tpu_custom_call.1}
  #allocation0 [shape = 'u32[]', space=smem, size = 0x4, offset = 0x4, fixed_abs, tag = 'smem constant byte address 0x4 - core index']
  #allocation1 [shape = 'u32[144,128]{1,0:T(1,128)}', space=vmem, size = 0x12000, scoped, tag = 'internal scratch']
  #allocation2 [shape = 'f32[1,1]{1,0:T(1,128)S(1)}', space=vmem, size = 0x200, scoped, tag = 'scoped memory for tpu_custom_call.1']
  %s0 = inlined_call_operand.hbm [shape: f32[8,8], index: 0, kind: input, shape index: {}]
  %s1 = inlined_call_operand.hbm [shape: f32[8,16], index: 1, kind: input, shape index: {}]
  %s2 = inlined_call_operand.vmem [shape: f32[1,16], index: 2, kind: input, shape index: {}]
  %s3 = inlined_call_operand.vmem [shape: f32[1,16], index: 3, kind: input, shape index: {}]
  %s4 = inlined_call_operand.<no memory space> [shape: f32[1,1], index: 4, kind: input, shape index: {}]
  %s5 = inlined_call_operand.hbm [shape: f32[1,8], index: 5, kind: output, shape index: {}]
  %s6 = sld [smem:[#allocation0]]
  $region38: #{tpu_custom_call.1} parent=0
    _
  %s8 = ssub.s32 1, %s6
  %s9 = scalar_select 0, %s8, %s6
  %v10 = vstv %s4
  %11 = vst [vmem:[#allocation2] sm:$0x1] %v10
  $region1: #{tpu_custom_call.1} parent=0
    #allocation3 [shape = 'u8[4096]{0}', space=vmem, size = 0x1000, scoped, tag = 'input window, operand 0, single buffered']
    #allocation4 [shape = 's32[1]{0}', space=sflag, size = 0x4, scoped, tag = 'scoped memory for tpu_custom_call.1']
    #allocation5 [shape = 's32[1]{0}', space=sflag, size = 0x4, scoped, tag = 'scoped memory for tpu_custom_call.1']
    #allocation6 [shape = 'u8[4096]{0}', space=vmem, size = 0x1000, scoped, tag = 'input window, operand 1, single buffered']
    #allocation7 [shape = 's32[1]{0}', space=sflag, size = 0x4, scoped, tag = 'scoped memory for tpu_custom_call.1']
    #allocation8 [shape = 'u8[512]{0}', space=vmem, size = 0x400, scoped, tag = 'output window, operand 0, single buffered']
    %12 = vsyncpa [#allocation4], 0
    %13 = vsyncpa [#allocation7], 0
    %14 = vsyncpa [#allocation5], 0
    // Predicated region
    $region2: #{tpu_custom_call.1} parent=1 // pred_check
      _
    $region3: #{tpu_custom_call.1} parent=1 // pred_check_branch
      %16 = sbr.rel (0) target = $region5
    $region4: #{tpu_custom_call.1} parent=1 // pred_region
      %s18 = ssub.s32 128, 128
      %19 = vsyncadd [#allocation4], %s18
      %s21 = sshll.u32 [#allocation3], 4
      %s22 = int_to_ptr.vmem [resolvable:$true] %s21
      %24 = dma.hbm_to_vmem [thread:$0]  %s0, 128, %s22, [#allocation4]
    $region5: #{tpu_custom_call.1} parent=1 // pred_fallthru
      _
    // Predicated region
    $region6: #{tpu_custom_call.1} parent=1 // pred_check
      _
    $region7: #{tpu_custom_call.1} parent=1 // pred_check_branch
      %26 = sbr.rel (0) target = $region9
    $region8: #{tpu_custom_call.1} parent=1 // pred_region
      %s28 = ssub.s32 128, 128
      %29 = vsyncadd [#allocation7], %s28
      %s31 = sshll.u32 [#allocation6], 4
      %s32 = int_to_ptr.vmem [resolvable:$true] %s31
      %34 = dma.hbm_to_vmem [thread:$0]  %s1, 128, %s32, [#allocation7]
    $region9: #{tpu_custom_call.1} parent=1 // pred_fallthru
      _
    // Predicated region
    $region10: #{tpu_custom_call.1} parent=1 // pred_check
      _
    $region11: #{tpu_custom_call.1} parent=1 // pred_check_branch
      %36 = sbr.rel (0) target = $region13
    $region12: #{tpu_custom_call.1} parent=1 // pred_region
      _
    $region13: #{tpu_custom_call.1} parent=1 // pred_fallthru
      _
    // Predicated region
    $region14: #{tpu_custom_call.1} parent=1 // pred_check
      _
    $region15: #{tpu_custom_call.1} parent=1 // pred_check_branch
      %38 = sbr.rel (0) target = $region17
    $region16: #{tpu_custom_call.1} parent=1 // pred_region
      _
    $region17: #{tpu_custom_call.1} parent=1 // pred_fallthru
      _
    // Predicated region
    $region18: #{tpu_custom_call.1} parent=1 // pred_check
      _
    $region19: #{tpu_custom_call.1} parent=1 // pred_check_branch
      %40 = sbr.rel (0) target = $region21
    $region20: #{tpu_custom_call.1} parent=1 // pred_region
      _
    $region21: #{tpu_custom_call.1} parent=1 // pred_fallthru
      _
    // Predicated region
    $region22: #{tpu_custom_call.1} parent=1 // pred_check
      _
    $region23: #{tpu_custom_call.1} parent=1 // pred_check_branch
      %42 = sbr.rel (0) target = $region25
    $region24: #{tpu_custom_call.1} parent=1 // pred_region
      %43 = dma.done [#allocation4], 128
    $region25: #{tpu_custom_call.1} parent=1 // pred_fallthru
      _
    // Predicated region
    $region26: #{tpu_custom_call.1} parent=1 // pred_check
      _
    $region27: #{tpu_custom_call.1} parent=1 // pred_check_branch
      %45 = sbr.rel (0) target = $region29
    $region28: #{tpu_custom_call.1} parent=1 // pred_region
      %46 = dma.done [#allocation7], 128
    $region29: #{tpu_custom_call.1} parent=1 // pred_fallthru
      _
    %v47 = vld [vmem:[#allocation3] sm:$0xff]
    %v48 = vld [vmem:[#allocation6] sm:$0xff]
    %v49 = vld [vmem:[%s2] sm:$0x1]
    %v51 = vlaneseq
    %v52 = vshrl.u32 %v51, 7
    %v53 = vsub.s32 0, %v52
    %v54 = vrot.slane %v49, %v53
    %vm56 = vcmask 64512
    %v58 = vsel %vm56, %v47, 0
    %60 = vmatprep.subr.mxu0 0.0
    %61 = vmatpush1.msra.mxu0 %v48
    %62 = vmatprep.subr.mxu0 0.0
    %63 = vmatpush1.msra.mxu0 0.0
    %64 = vmatprep.subr.mxu0 0.0
    %65 = vmatpush1.msra.mxu0 0.0
    %66 = vmatprep.subr.mxu0 0.0
    %67 = vmatpush1.msra.mxu0 0.0
    %68 = vmatprep.subr.mxu0 0.0
    %69 = vmatpush1.msra.mxu0 0.0
    %70 = vmatprep.subr.mxu0 0.0
    %71 = vmatpush1.msra.mxu0 0.0
    %72 = vmatprep.subr.mxu0 0.0
    %73 = vmatpush1.msra.mxu0 0.0
    %74 = vmatprep.subr.mxu0 0.0
    %75 = vmatpush1.msra.mxu0 0.0
    %76 = vmatprep.subr.mxu0 0.0
    %77 = vmatpush1.msra.mxu0 0.0
    %78 = vmatprep.subr.mxu0 0.0
    %79 = vmatpush1.msra.mxu0 0.0
    %80 = vmatprep.subr.mxu0 0.0
    %81 = vmatpush1.msra.mxu0 0.0
    %82 = vmatprep.subr.mxu0 0.0
    %83 = vmatpush1.msra.mxu0 0.0
    %84 = vmatprep.subr.mxu0 0.0
    %85 = vmatpush1.msra.mxu0 0.0
    %86 = vmatprep.subr.mxu0 0.0
    %87 = vmatpush1.msra.mxu0 0.0
    %88 = vmatprep.subr.mxu0 0.0
    %89 = vmatpush1.msra.mxu0 0.0
    %90 = vmatprep.subr.mxu0 0.0
    %91 = vmatpush1.msra.mxu0 0.0
    %92 = vmatprep.subr.mxu0 0.0
    %93 = vmatpush1.msra.mxu0 0.0
    %94 = vmatprep.subr.mxu0 0.0
    %95 = vmatpush1.msra.mxu0 0.0
    %96 = vmatprep.subr.mxu0 0.0
    %97 = vmatpush1.msra.mxu0 0.0
    %98 = vmatprep.subr.mxu0 0.0
    %99 = vmatpush1.msra.mxu0 0.0
    %100 = vmatprep.subr.mxu0 0.0
    %101 = vmatpush1.msra.mxu0 0.0
    %102 = vmatprep.subr.mxu0 0.0
    %103 = vmatpush1.msra.mxu0 0.0
    %104 = vmatprep.subr.mxu0 0.0
    %105 = vmatpush1.msra.mxu0 0.0
    %106 = vmatprep.subr.mxu0 0.0
    %107 = vmatpush1.msra.mxu0 0.0
    %108 = vmatprep.subr.mxu0 0.0
    %109 = vmatpush1.msra.mxu0 0.0
    %110 = vmatprep.subr.mxu0 0.0
    %111 = vmatpush1.msra.mxu0 0.0
    %112 = vmatprep.subr.mxu0 0.0
    %113 = vmatpush1.msra.mxu0 0.0
    %114 = vmatprep.subr.mxu0 0.0
    %115 = vmatpush1.msra.mxu0 0.0
    %116 = vmatprep.subr.mxu0 0.0
    %117 = vmatpush1.msra.mxu0 0.0
    %118 = vmatprep.subr.mxu0 0.0
    %119 = vmatpush1.msra.mxu0 0.0
    %120 = vmatprep.subr.mxu0 0.0
    %121 = vmatpush1.msra.mxu0 0.0
    %122 = vmatprep.subr.mxu0 0.0
    %123 = vmatpush1.msra.mxu0 0.0
    %124 = vmatprep.mubr.f32.mxu0 0.0
    %125 = vmatmul.mubr.f32.gmra.mrb[0].mxu0 %v58
    %v126 = vpop.f32.mrb[0].mxu0
    %v127 = vadd.f32 %v54, %v126
    %v128 = vpop.f32.mrb[0].mxu0
    %129 = vdwg.mxu0
    %v130 = vmax.f32 %v127, 0.0
    %v131 = vld [vmem:[%s3] sm:$0x1]
    %v132 = vld [vmem:[#allocation2] sm:$0x1]
    %134 = vset.pattern.permute.xlu0 0
    %135 = vperm.xlu0 %134, %v132
    %v136 = vpop.permute.xlu0 %135
    %v138 = vlaneseq
    %v139 = vshrl.u32 %v138, 7
    %v140 = vsub.s32 0, %v139
    %v141 = vrot.slane %v136, %v140
    %vm142 = vcmask 130048
    %v144 = vsel %vm142, %v131, 0
    %v147 = vsel %vm142, %v130, 0
    %149 = vmatprep.subr.mxu0 0.0
    %150 = vmatpush1.xpose.msra.mxu0 %v147
    %151 = vmatprep.subr.mxu0 0.0
    %152 = vmatpush1.xpose.msra.mxu0 0.0
    %153 = vmatprep.subr.mxu0 0.0
    %154 = vmatpush1.xpose.msra.mxu0 0.0
    %155 = vmatprep.subr.mxu0 0.0
    %156 = vmatpush1.xpose.msra.mxu0 0.0
    %157 = vmatprep.subr.mxu0 0.0
    %158 = vmatpush1.xpose.msra.mxu0 0.0
    %159 = vmatprep.subr.mxu0 0.0
    %160 = vmatpush1.xpose.msra.mxu0 0.0
    %161 = vmatprep.subr.mxu0 0.0
    %162 = vmatpush1.xpose.msra.mxu0 0.0
    %163 = vmatprep.subr.mxu0 0.0
    %164 = vmatpush1.xpose.msra.mxu0 0.0
    %165 = vmatprep.subr.mxu0 0.0
    %166 = vmatpush1.xpose.msra.mxu0 0.0
    %167 = vmatprep.subr.mxu0 0.0
    %168 = vmatpush1.xpose.msra.mxu0 0.0
    %169 = vmatprep.subr.mxu0 0.0
    %170 = vmatpush1.xpose.msra.mxu0 0.0
    %171 = vmatprep.subr.mxu0 0.0
    %172 = vmatpush1.xpose.msra.mxu0 0.0
    %173 = vmatprep.subr.mxu0 0.0
    %174 = vmatpush1.xpose.msra.mxu0 0.0
    %175 = vmatprep.subr.mxu0 0.0
    %176 = vmatpush1.xpose.msra.mxu0 0.0
    %177 = vmatprep.subr.mxu0 0.0
    %178 = vmatpush1.xpose.msra.mxu0 0.0
    %179 = vmatprep.subr.mxu0 0.0
    %180 = vmatpush1.xpose.msra.mxu0 0.0
    %181 = vmatprep.subr.mxu0 0.0
    %182 = vmatpush1.xpose.msra.mxu0 0.0
    %183 = vmatprep.subr.mxu0 0.0
    %184 = vmatpush1.xpose.msra.mxu0 0.0
    %185 = vmatprep.subr.mxu0 0.0
    %186 = vmatpush1.xpose.msra.mxu0 0.0
    %187 = vmatprep.subr.mxu0 0.0
    %188 = vmatpush1.xpose.msra.mxu0 0.0
    %189 = vmatprep.subr.mxu0 0.0
    %190 = vmatpush1.xpose.msra.mxu0 0.0
    %191 = vmatprep.subr.mxu0 0.0
    %192 = vmatpush1.xpose.msra.mxu0 0.0
    %193 = vmatprep.subr.mxu0 0.0
    %194 = vmatpush1.xpose.msra.mxu0 0.0
    %195 = vmatprep.subr.mxu0 0.0
    %196 = vmatpush1.xpose.msra.mxu0 0.0
    %197 = vmatprep.subr.mxu0 0.0
    %198 = vmatpush1.xpose.msra.mxu0 0.0
    %199 = vmatprep.subr.mxu0 0.0
    %200 = vmatpush1.xpose.msra.mxu0 0.0
    %201 = vmatprep.subr.mxu0 0.0
    %202 = vmatpush1.xpose.msra.mxu0 0.0
    %203 = vmatprep.subr.mxu0 0.0
    %204 = vmatpush1.xpose.msra.mxu0 0.0
    %205 = vmatprep.subr.mxu0 0.0
    %206 = vmatpush1.xpose.msra.mxu0 0.0
    %207 = vmatprep.subr.mxu0 0.0
    %208 = vmatpush1.xpose.msra.mxu0 0.0
    %209 = vmatprep.subr.mxu0 0.0
    %210 = vmatpush1.xpose.msra.mxu0 0.0
    %211 = vmatprep.subr.mxu0 0.0
    %212 = vmatpush1.xpose.msra.mxu0 0.0
    %213 = vmatprep.mubr.f32.mxu0 0.0
    %214 = vmatmul.mubr.f32.gmra.mrb[0].mxu0 %v144
    %v215 = vpop.f32.mrb[0].mxu0
    %v216 = vadd.f32 %v141, %v215
    %v217 = vpop.f32.mrb[0].mxu0
    %218 = vdwg.mxu0
    %vm219 = vcmask 57344
    %220 = vst.msk [vmem:[#allocation8] sm:$0x1] %vm219, %v216
    // Predicated region
    $region30: #{tpu_custom_call.1} parent=1 // pred_check
      _
    $region31: #{tpu_custom_call.1} parent=1 // pred_check_branch
      %222 = sbr.rel (0) target = $region33
    $region32: #{tpu_custom_call.1} parent=1 // pred_region
      %s224 = ssub.s32 16, 16
      %225 = vsyncadd [#allocation5], %s224
      %s227 = sshll.u32 [#allocation8], 4
      %s228 = int_to_ptr.vmem [resolvable:$true] %s227
      %230 = dma.vmem_to_hbm [thread:$0]  %s228, 16, %s5, [#allocation5]
    $region33: #{tpu_custom_call.1} parent=1 // pred_fallthru
      _
    // Predicated region
    $region34: #{tpu_custom_call.1} parent=1 // pred_check
      _
    $region35: #{tpu_custom_call.1} parent=1 // pred_check_branch
      %232 = sbr.rel (0) target = $region37
    $region36: #{tpu_custom_call.1} parent=1 // pred_region
      %233 = dma.done [#allocation5], 16
    $region37: #{tpu_custom_call.1} parent=1 // pred_fallthru
      _
    %234 = vsyncpa [#allocation4], 1
    %235 = vsyncpa [#allocation7], 1
    %236 = vsyncpa [#allocation5], 1

</llo_original>
